<compile_context>
chip_gen: v6e
topology: v6e:2x2x1
jax: 0.10.0
libtpu: 0.0.40
codegen_flags: <defaults>
</compile_context>

<pallas_src>
import functools

import jax
import jax.numpy as jnp
from jax import lax
from jax.experimental import pallas as pl
from jax.experimental.pallas import tpu as pltpu


def _round_up(x, m):
    return (x + m - 1) // m * m


# ---------------------------------------------------------------------------
# Fused kernel: conv(im2col matmul)+bias+ReLU+GAP  ->  instance/cluster heads
# ---------------------------------------------------------------------------

def _fused_kernel(im_ref, wc_ref, bc_ref,
                  w1_ref, b1_ref, w2_ref, b2_ref,
                  w3_ref, b3_ref, w4_ref, b4_ref,
                  z_ref, c_ref, pooled_ref, *, hw, class_num):
    """One batch-tile per grid step.

    im_ref:     (NB, HW, K9P)   bf16 pre-packed im2col patches
    wc_ref:     (K9P, CMID_P)   bf16 conv taps (tap-major, channel-fastest)
    bc_ref:     (1, CMID_P)     f32 conv bias
    w1/b1:      folded backbone-fc + instance projector layer 1
    w2/b2:      instance projector layer 2   (output lanes padded to 128)
    w3/b3:      folded backbone-fc + cluster projector layer 1
    w4/b4:      cluster projector layer 2    (output lanes padded to 128)
    z_ref:      (NB, FEAT_P)    f32 normalized instance features
    c_ref:      (NB, CLS_P)     f32 softmax cluster assignments
    pooled_ref: (NB, CMID_P)    f32 scratch, per-image pooled conv features
    """
    nb = im_ref.shape[0]

    # ---- backbone trunk: per-image conv as ONE im2col matmul, fused
    #      bias + ReLU + global-average-pool.  One image per fori_loop
    #      iteration bounds live vregs / VMEM (portable to v7x's 64 MiB).
    def conv_one(b, carry):
        lhs = im_ref[b]                                           # (HW, K9P) bf16
        conv = jnp.dot(lhs, wc_ref[...],
                       preferred_element_type=jnp.float32)        # (HW, CMID_P) f32
        act = jnp.maximum(conv + bc_ref[...], 0.0)                # bias + ReLU
        pooled_ref[pl.ds(b, 1), :] = jnp.sum(act, axis=0, keepdims=True)
        return carry

    lax.fori_loop(0, nb, conv_one, 0)
    pooled = (pooled_ref[...] * (1.0 / hw)).astype(jnp.bfloat16)  # GAP  (NB, CMID_P)

    def mm(a, w_ref_):  # bf16 MXU inputs, f32 accumulation
        return jnp.dot(a, w_ref_[...], preferred_element_type=jnp.float32)

    # ---- instance_projector (backbone fc folded into layer 1):
    #      Linear -> ReLU -> Linear, then F.normalize(dim=1)
    t = jnp.maximum(mm(pooled, w1_ref) + b1_ref[...], 0.0)
    zi = mm(t.astype(jnp.bfloat16), w2_ref) + b2_ref[...]
    ssq = jnp.sum(zi * zi, axis=1, keepdims=True)
    # padded feature lanes are exactly zero, so the norm is unaffected;
    # max(ssq, 1e-24) matches torch F.normalize eps=1e-12 on the norm.
    z_ref[...] = zi * lax.rsqrt(jnp.maximum(ssq, 1e-24))

    # ---- cluster_projector: Linear -> ReLU -> Linear -> Softmax(dim=1)
    u = jnp.maximum(mm(pooled, w3_ref) + b3_ref[...], 0.0)
    logits = mm(u.astype(jnp.bfloat16), w4_ref) + b4_ref[...]
    col = lax.broadcasted_iota(jnp.int32, logits.shape, 1)
    logits = jnp.where(col < class_num, logits, -1e30)            # mask lane padding
    mx = jnp.max(logits, axis=1, keepdims=True)
    e = jnp.exp(logits - mx)
    denom = jnp.sum(e, axis=1, keepdims=True)
    c_ref[...] = e * pl.reciprocal(denom, approx=True)            # EUP slot


# ---------------------------------------------------------------------------
# Wrapper
# ---------------------------------------------------------------------------

def _im2col_nchw(x_nchw):
    """NCHW -> bf16 (N, H*W, 9*C) im2col, zero padding=1, tap-major/channel-fastest."""
    x = jnp.transpose(x_nchw, (0, 2, 3, 1)).astype(jnp.bfloat16)   # NHWC, bf16 once
    n, h, w, c = x.shape
    xp = jnp.pad(x, ((0, 0), (1, 1), (1, 1), (0, 0)))
    taps = [xp[:, dh:dh + h, dw:dw + w, :] for dh in range(3) for dw in range(3)]
    patches = jnp.stack(taps, axis=3)                              # (N, H, W, 9, C)
    return patches.reshape(n, h * w, 9 * c)


def _batch_tile(n):
    """Images per grid step; keep >= 2 grid steps so both v7x TCs get work."""
    for t in (256, 128, 64, 32, 16, 8):
        if n >= 2 * t:
            return t
    return 8


def network_forward(x_i, x_j, params, *, feature_dim, class_num):
    """Network.forward: both views batched through one fused backbone+head pass."""
    x = jnp.concatenate([x_i, x_j], axis=0)                        # (2B, C, H, W)
    n = x.shape[0]
    h, w = x.shape[2], x.shape[3]
    hw = h * w

    im = _im2col_nchw(x)                                           # (2B, HW, 9C) bf16
    k9 = im.shape[-1]

    k9p = params["wc"].shape[0]
    cmid_p = params["wc"].shape[-1]
    feat_p = params["w2"].shape[-1]
    cls_p = params["w4"].shape[-1]

    nb = _batch_tile(n)
    n_pad = max(_round_up(n, nb), 2 * nb)                          # >= 2 grid steps
    im = jnp.pad(im, ((0, n_pad - n), (0, 0), (0, k9p - k9)))      # zero rows are safe

    def full(a):
        return pl.BlockSpec(a.shape, lambda i, _nd=a.ndim: (0,) * _nd)

    args = (im, params["wc"], params["bc"],
            params["w1"], params["b1"], params["w2"], params["b2"],
            params["w3"], params["b3"], params["w4"], params["b4"])
    in_specs = ([pl.BlockSpec((nb, hw, k9p), lambda i: (i, 0, 0))]
                + [full(a) for a in args[1:]])

    z_pad, c_pad = pl.pallas_call(
        functools.partial(_fused_kernel, hw=hw, class_num=class_num),
        out_shape=(jax.ShapeDtypeStruct((n_pad, feat_p), jnp.float32),
                   jax.ShapeDtypeStruct((n_pad, cls_p), jnp.float32)),
        grid=(n_pad // nb,),
        in_specs=in_specs,
        out_specs=(pl.BlockSpec((nb, feat_p), lambda i: (i, 0)),
                   pl.BlockSpec((nb, cls_p), lambda i: (i, 0))),
        scratch_shapes=[pltpu.VMEM((nb, cmid_p), jnp.float32)],
        compiler_params=pltpu.CompilerParams(
            dimension_semantics=("parallel",),
            vmem_limit_bytes=32 * 1024 * 1024,                      # KB-scale usage
        ),
    )(*args)

    b = x_i.shape[0]
    z = z_pad[:n, :feature_dim]
    c = c_pad[:n, :class_num]
    return z[:b], z[b:], c[:b], c[b:]


# ---------------------------------------------------------------------------
# Deterministic parameter init (kernel-ready: folded, padded, bf16 weights)
# ---------------------------------------------------------------------------

def init_params(key, c_in, c_mid, rep_dim, feature_dim, class_num):
    lane = 128
    sub = 16                      # bf16 sublane granule for weight K axes
    k9 = 9 * c_in
    k9p = _round_up(k9, sub)
    cmid_p = _round_up(c_mid, sub)
    rep_p = _round_up(rep_dim, sub)
    feat_p = _round_up(feature_dim, lane)   # final output lanes -> 128-dense
    cls_p = _round_up(class_num, lane)

    ks = jax.random.split(key, 6)

    def lin(k, fan_in, fan_out):
        s = 1.0 / jnp.sqrt(jnp.float32(fan_in))
        return (jax.random.uniform(k, (fan_in, fan_out), jnp.float32, -s, s),
                jnp.zeros((fan_out,), jnp.float32))

    # stand-in backbone trunk: 3x3 conv taps flattened (tap-major, channel-fastest)
    s = 1.0 / jnp.sqrt(jnp.float32(k9))
    wc = jax.random.uniform(ks[0], (k9, c_mid), jnp.float32, -s, s)
    bc = jnp.zeros((c_mid,), jnp.float32)

    wf, bf = lin(ks[1], c_mid, rep_dim)          # backbone fc -> rep_dim (linear)
    w1, b1 = lin(ks[2], rep_dim, rep_dim)        # instance projector layer 1
    w2, b2 = lin(ks[3], rep_dim, feature_dim)    # instance projector layer 2
    w3, b3 = lin(ks[4], rep_dim, rep_dim)        # cluster  projector layer 1
    w4, b4 = lin(ks[5], rep_dim, class_num)      # cluster  projector layer 2

    # fold the (purely linear) backbone fc into both projector first layers
    w1p, b1p = wf @ w1, bf @ w1 + b1             # (c_mid, rep), (rep,)
    w3p, b3p = wf @ w3, bf @ w3 + b3

    def pack_w(wm, rows, cols):
        return jnp.pad(wm, ((0, rows - wm.shape[0]),
                            (0, cols - wm.shape[1]))).astype(jnp.bfloat16)

    def pack_b(bv, cols):
        return jnp.pad(bv, (0, cols - bv.shape[0])).reshape(1, cols).astype(jnp.float32)

    return dict(
        wc=pack_w(wc, k9p, cmid_p), bc=pack_b(bc, cmid_p),
        w1=pack_w(w1p, cmid_p, rep_p), b1=pack_b(b1p, rep_p),
        w2=pack_w(w2, rep_p, feat_p),  b2=pack_b(b2, feat_p),
        w3=pack_w(w3p, cmid_p, rep_p), b3=pack_b(b3p, rep_p),
        w4=pack_w(w4, rep_p, cls_p),   b4=pack_b(b4, cls_p),
    )


# ---------------------------------------------------------------------------

if __name__ == "__main__":
    B, C, H, W = 2, 4, 16, 16
    C_MID, REP_DIM, FEATURE_DIM, CLASS_NUM = 8, 32, 16, 10

    root = jax.random.PRNGKey(0)
    k_params, k_xi, k_xj = jax.random.split(root, 3)

    params = init_params(k_params, C, C_MID, REP_DIM, FEATURE_DIM, CLASS_NUM)
    x_i = jax.random.normal(k_xi, (B, C, H, W), jnp.float32)   # PyTorch-style NCHW
    x_j = jax.random.normal(k_xj, (B, C, H, W), jnp.float32)

    fwd = jax.jit(functools.partial(network_forward,
                                    feature_dim=FEATURE_DIM,
                                    class_num=CLASS_NUM))
    z_i, z_j, c_i, c_j = fwd(x_i, x_j, params)
    jax.block_until_ready((z_i, z_j, c_i, c_j))

    assert z_i.shape == (B, FEATURE_DIM) and z_j.shape == (B, FEATURE_DIM)
    assert c_i.shape == (B, CLASS_NUM) and c_j.shape == (B, CLASS_NUM)
    # z rows are unit-norm, c rows are valid softmax distributions
    assert bool(jnp.allclose(jnp.linalg.norm(z_i, axis=1), 1.0, atol=2e-3))
    assert bool(jnp.allclose(jnp.linalg.norm(z_j, axis=1), 1.0, atol=2e-3))
    assert bool(jnp.allclose(jnp.sum(c_i, axis=1), 1.0, atol=5e-3))
    assert bool(jnp.allclose(jnp.sum(c_j, axis=1), 1.0, atol=5e-3))
    assert bool(jnp.all(c_i >= 0.0)) and bool(jnp.all(c_j >= 0.0))

    print("KERNEL_OK")
</pallas_src>

<mosaic_0001>
module attributes {stable_mosaic.version = 11 : i64} {
  func.func @_fused_kernel(%arg0: i32, %arg1: memref<8x256x48xbf16, #tpu.memory_space<vmem>>, %arg2: memref<48x16xbf16, #tpu.memory_space<vmem>>, %arg3: memref<1x16xf32, #tpu.memory_space<vmem>>, %arg4: memref<16x32xbf16, #tpu.memory_space<vmem>>, %arg5: memref<1x32xf32, #tpu.memory_space<vmem>>, %arg6: memref<32x128xbf16, #tpu.memory_space<vmem>>, %arg7: memref<1x128xf32, #tpu.memory_space<vmem>>, %arg8: memref<16x32xbf16, #tpu.memory_space<vmem>>, %arg9: memref<1x32xf32, #tpu.memory_space<vmem>>, %arg10: memref<32x128xbf16, #tpu.memory_space<vmem>>, %arg11: memref<1x128xf32, #tpu.memory_space<vmem>>, %arg12: memref<8x128xf32, #tpu.memory_space<vmem>>, %arg13: memref<8x128xf32, #tpu.memory_space<vmem>>, %arg14: memref<8x16xf32, #tpu.memory_space<vmem>>) attributes {dimension_semantics = [#tpu.dimension_semantics<parallel>], iteration_bounds = array<i64: 2>, scalar_prefetch = 0 : i64, scratch_operands = 1 : i64, tpu.core_type = #tpu.core_type<tc>, window_params = [{transform_indices = @transform_0, window_bounds = array<i64: 8, 256, 48>}, {pipeline_mode = #tpu.pipeline_mode<synchronous>, transform_indices = @transform_1, window_bounds = array<i64: 48, 16>}, {pipeline_mode = #tpu.pipeline_mode<synchronous>, transform_indices = @transform_2, window_bounds = array<i64: 1, 16>}, {pipeline_mode = #tpu.pipeline_mode<synchronous>, transform_indices = @transform_3, window_bounds = array<i64: 16, 32>}, {pipeline_mode = #tpu.pipeline_mode<synchronous>, transform_indices = @transform_4, window_bounds = array<i64: 1, 32>}, {pipeline_mode = #tpu.pipeline_mode<synchronous>, transform_indices = @transform_5, window_bounds = array<i64: 32, 128>}, {pipeline_mode = #tpu.pipeline_mode<synchronous>, transform_indices = @transform_6, window_bounds = array<i64: 1, 128>}, {pipeline_mode = #tpu.pipeline_mode<synchronous>, transform_indices = @transform_7, window_bounds = array<i64: 16, 32>}, {pipeline_mode = #tpu.pipeline_mode<synchronous>, transform_indices = @transform_8, window_bounds = array<i64: 1, 32>}, {pipeline_mode = #tpu.pipeline_mode<synchronous>, transform_indices = @transform_9, window_bounds = array<i64: 32, 128>}, {pipeline_mode = #tpu.pipeline_mode<synchronous>, transform_indices = @transform_10, window_bounds = array<i64: 1, 128>}, {transform_indices = @transform_11, window_bounds = array<i64: 8, 128>}, {transform_indices = @transform_12, window_bounds = array<i64: 8, 128>}]} {
    %c0_i32 = arith.constant 0 : i32
    %c8_i32 = arith.constant 8 : i32
    %0 = arith.addi %c0_i32, %c8_i32 : i32
    %c1_i32 = arith.constant 1 : i32
    scf.for %arg15 = %c0_i32 to %0 step %c1_i32  : i32 {
      %56 = arith.index_cast %arg15 : i32 to index
      %c0_33 = arith.constant 0 : index
      %c0_34 = arith.constant 0 : index
      %57 = vector.load %arg1[%56, %c0_33, %c0_34] : memref<8x256x48xbf16, #tpu.memory_space<vmem>>, vector<1x256x48xbf16>
      %58 = vector.shape_cast %57 : vector<1x256x48xbf16> to vector<256x48xbf16>
      %c0_35 = arith.constant 0 : index
      %c0_36 = arith.constant 0 : index
      %59 = vector.load %arg2[%c0_35, %c0_36] : memref<48x16xbf16, #tpu.memory_space<vmem>>, vector<48x16xbf16>
      %cst_37 = arith.constant dense<0.000000e+00> : vector<256x16xf32>
      %60 = tpu.matmul %58, %59, %cst_37 {dimension_numbers = #tpu.dot_dimension_numbers<[1], [0], [0], [1], [0, 0, 1, 1], [], []>} : vector<256x48xbf16>, vector<48x16xbf16>, vector<256x16xf32> -> vector<256x16xf32>
      %c0_38 = arith.constant 0 : index
      %c0_39 = arith.constant 0 : index
      %61 = vector.load %arg3[%c0_38, %c0_39] : memref<1x16xf32, #tpu.memory_space<vmem>>, vector<1x16xf32>
      %62 = vector.broadcast %61 : vector<1x16xf32> to vector<256x16xf32>
      %63 = arith.addf %60, %62 : vector<256x16xf32>
      %cst_40 = arith.constant 0.000000e+00 : f32
      %64 = vector.broadcast %cst_40 : f32 to vector<256x16xf32>
      %65 = arith.maximumf %63, %64 : vector<256x16xf32>
      %cst_41 = arith.constant dense<0.000000e+00> : vector<16xf32>
      %66 = vector.multi_reduction <add>, %65, %cst_41 [0] : vector<256x16xf32> to vector<16xf32>
      %67 = vector.shape_cast %66 : vector<16xf32> to vector<1x16xf32>
      %68 = arith.index_cast %arg15 : i32 to index
      %c0_42 = arith.constant 0 : index
      %69 = vector.load %arg14[%68, %c0_42] : memref<8x16xf32, #tpu.memory_space<vmem>>, vector<1x16xf32>
      tpu.vector_store %arg14[%68, %c0_42], %67 {strides = array<i32>} : memref<8x16xf32, #tpu.memory_space<vmem>>, vector<1x16xf32>,
    }
    %c8_i32_0 = arith.constant 8 : i32
    %c0 = arith.constant 0 : index
    %c0_1 = arith.constant 0 : index
    %1 = vector.load %arg14[%c0, %c0_1] : memref<8x16xf32, #tpu.memory_space<vmem>>, vector<8x16xf32>
    %cst = arith.constant 3.906250e-03 : f32
    %2 = vector.broadcast %cst : f32 to vector<8x16xf32>
    %3 = arith.mulf %1, %2 : vector<8x16xf32>
    %4 = arith.truncf %3 : vector<8x16xf32> to vector<8x16xbf16>
    %c0_2 = arith.constant 0 : index
    %c0_3 = arith.constant 0 : index
    %5 = vector.load %arg4[%c0_2, %c0_3] : memref<16x32xbf16, #tpu.memory_space<vmem>>, vector<16x32xbf16>
    %cst_4 = arith.constant dense<0.000000e+00> : vector<8x32xf32>
    %6 = tpu.matmul %4, %5, %cst_4 {dimension_numbers = #tpu.dot_dimension_numbers<[1], [0], [0], [1], [0, 0, 1, 1], [], []>} : vector<8x16xbf16>, vector<16x32xbf16>, vector<8x32xf32> -> vector<8x32xf32>
    %c0_5 = arith.constant 0 : index
    %c0_6 = arith.constant 0 : index
    %7 = vector.load %arg5[%c0_5, %c0_6] : memref<1x32xf32, #tpu.memory_space<vmem>>, vector<1x32xf32>
    %8 = vector.broadcast %7 : vector<1x32xf32> to vector<8x32xf32>
    %9 = arith.addf %6, %8 : vector<8x32xf32>
    %cst_7 = arith.constant 0.000000e+00 : f32
    %10 = vector.broadcast %cst_7 : f32 to vector<8x32xf32>
    %11 = arith.maximumf %9, %10 : vector<8x32xf32>
    %12 = arith.truncf %11 : vector<8x32xf32> to vector<8x32xbf16>
    %c0_8 = arith.constant 0 : index
    %c0_9 = arith.constant 0 : index
    %13 = vector.load %arg6[%c0_8, %c0_9] : memref<32x128xbf16, #tpu.memory_space<vmem>>, vector<32x128xbf16>
    %cst_10 = arith.constant dense<0.000000e+00> : vector<8x128xf32>
    %14 = tpu.matmul %12, %13, %cst_10 {dimension_numbers = #tpu.dot_dimension_numbers<[1], [0], [0], [1], [0, 0, 1, 1], [], []>} : vector<8x32xbf16>, vector<32x128xbf16>, vector<8x128xf32> -> vector<8x128xf32>
    %c0_11 = arith.constant 0 : index
    %c0_12 = arith.constant 0 : index
    %15 = vector.load %arg7[%c0_11, %c0_12] : memref<1x128xf32, #tpu.memory_space<vmem>>, vector<1x128xf32>
    %16 = vector.broadcast %15 : vector<1x128xf32> to vector<8x128xf32>
    %17 = arith.addf %14, %16 : vector<8x128xf32>
    %18 = arith.mulf %17, %17 : vector<8x128xf32>
    %cst_13 = arith.constant dense<0.000000e+00> : vector<8xf32>
    %19 = vector.multi_reduction <add>, %18, %cst_13 [1] : vector<8x128xf32> to vector<8xf32>
    %20 = vector.shape_cast %19 : vector<8xf32> to vector<8x1xf32>
    %cst_14 = arith.constant 1.000000e-24 : f32
    %21 = vector.broadcast %cst_14 : f32 to vector<8x1xf32>
    %22 = arith.maximumf %20, %21 : vector<8x1xf32>
    %23 = math.rsqrt %22 : vector<8x1xf32>
    %24 = vector.broadcast %23 : vector<8x1xf32> to vector<8x128xf32>
    %25 = arith.mulf %17, %24 : vector<8x128xf32>
    %c0_15 = arith.constant 0 : index
    %c0_16 = arith.constant 0 : index
    %26 = vector.load %arg12[%c0_15, %c0_16] : memref<8x128xf32, #tpu.memory_space<vmem>>, vector<8x128xf32>
    tpu.vector_store %arg12[%c0_15, %c0_16], %25 {strides = array<i32>} : memref<8x128xf32, #tpu.memory_space<vmem>>, vector<8x128xf32>,
    %c0_17 = arith.constant 0 : index
    %c0_18 = arith.constant 0 : index
    %27 = vector.load %arg8[%c0_17, %c0_18] : memref<16x32xbf16, #tpu.memory_space<vmem>>, vector<16x32xbf16>
    %cst_19 = arith.constant dense<0.000000e+00> : vector<8x32xf32>
    %28 = tpu.matmul %4, %27, %cst_19 {dimension_numbers = #tpu.dot_dimension_numbers<[1], [0], [0], [1], [0, 0, 1, 1], [], []>} : vector<8x16xbf16>, vector<16x32xbf16>, vector<8x32xf32> -> vector<8x32xf32>
    %c0_20 = arith.constant 0 : index
    %c0_21 = arith.constant 0 : index
    %29 = vector.load %arg9[%c0_20, %c0_21] : memref<1x32xf32, #tpu.memory_space<vmem>>, vector<1x32xf32>
    %30 = vector.broadcast %29 : vector<1x32xf32> to vector<8x32xf32>
    %31 = arith.addf %28, %30 : vector<8x32xf32>
    %cst_22 = arith.constant 0.000000e+00 : f32
    %32 = vector.broadcast %cst_22 : f32 to vector<8x32xf32>
    %33 = arith.maximumf %31, %32 : vector<8x32xf32>
    %34 = arith.truncf %33 : vector<8x32xf32> to vector<8x32xbf16>
    %c0_23 = arith.constant 0 : index
    %c0_24 = arith.constant 0 : index
    %35 = vector.load %arg10[%c0_23, %c0_24] : memref<32x128xbf16, #tpu.memory_space<vmem>>, vector<32x128xbf16>
    %cst_25 = arith.constant dense<0.000000e+00> : vector<8x128xf32>
    %36 = tpu.matmul %34, %35, %cst_25 {dimension_numbers = #tpu.dot_dimension_numbers<[1], [0], [0], [1], [0, 0, 1, 1], [], []>} : vector<8x32xbf16>, vector<32x128xbf16>, vector<8x128xf32> -> vector<8x128xf32>
    %c0_26 = arith.constant 0 : index
    %c0_27 = arith.constant 0 : index
    %37 = vector.load %arg11[%c0_26, %c0_27] : memref<1x128xf32, #tpu.memory_space<vmem>>, vector<1x128xf32>
    %38 = vector.broadcast %37 : vector<1x128xf32> to vector<8x128xf32>
    %39 = arith.addf %36, %38 : vector<8x128xf32>
    %40 = tpu.iota {dimensions = array<i32: 1>} : vector<8x128xi32>
    %c10_i32 = arith.constant 10 : i32
    %41 = vector.broadcast %c10_i32 : i32 to vector<8x128xi32>
    %42 = arith.cmpi slt, %40, %41 : vector<8x128xi32>
    %cst_28 = arith.constant -1.000000e+30 : f32
    %43 = vector.broadcast %cst_28 : f32 to vector<8x128xf32>
    %44 = arith.select %42, %39, %43 : vector<8x128xi1>, vector<8x128xf32>
    %cst_29 = arith.constant dense<0xFF800000> : vector<8xf32>
    %45 = vector.multi_reduction <maximumf>, %44, %cst_29 [1] : vector<8x128xf32> to vector<8xf32>
    %46 = vector.shape_cast %45 : vector<8xf32> to vector<8x1xf32>
    %47 = vector.broadcast %46 : vector<8x1xf32> to vector<8x128xf32>
    %48 = arith.subf %44, %47 : vector<8x128xf32>
    %49 = math.exp %48 : vector<8x128xf32>
    %cst_30 = arith.constant dense<0.000000e+00> : vector<8xf32>
    %50 = vector.multi_reduction <add>, %49, %cst_30 [1] : vector<8x128xf32> to vector<8xf32>
    %51 = vector.shape_cast %50 : vector<8xf32> to vector<8x1xf32>
    %52 = tpu.reciprocal %51 {approx = true} : vector<8x1xf32> -> vector<8x1xf32>
    %53 = vector.broadcast %52 : vector<8x1xf32> to vector<8x128xf32>
    %54 = arith.mulf %49, %53 : vector<8x128xf32>
    %c0_31 = arith.constant 0 : index
    %c0_32 = arith.constant 0 : index
    %55 = vector.load %arg13[%c0_31, %c0_32] : memref<8x128xf32, #tpu.memory_space<vmem>>, vector<8x128xf32>
    tpu.vector_store %arg13[%c0_31, %c0_32], %54 {strides = array<i32>} : memref<8x128xf32, #tpu.memory_space<vmem>>, vector<8x128xf32>,
    return
  }
  func.func @transform_0(%arg0: i32) -> (i32, i32, i32) {
    %c0_i32 = arith.constant 0 : i32
    %c0_i32_0 = arith.constant 0 : i32
    %c0_i32_1 = arith.constant 0 : i32
    return %arg0, %c0_i32, %c0_i32_0 : i32, i32, i32
  }
  func.func @transform_1(%arg0: i32) -> (i32, i32) {
    %c0_i32 = arith.constant 0 : i32
    %c0_i32_0 = arith.constant 0 : i32
    %c0_i32_1 = arith.constant 0 : i32
    return %c0_i32, %c0_i32_0 : i32, i32
  }
  func.func @transform_2(%arg0: i32) -> (i32, i32) {
    %c0_i32 = arith.constant 0 : i32
    %c0_i32_0 = arith.constant 0 : i32
    %c0_i32_1 = arith.constant 0 : i32
    return %c0_i32, %c0_i32_0 : i32, i32
  }
  func.func @transform_3(%arg0: i32) -> (i32, i32) {
    %c0_i32 = arith.constant 0 : i32
    %c0_i32_0 = arith.constant 0 : i32
    %c0_i32_1 = arith.constant 0 : i32
    return %c0_i32, %c0_i32_0 : i32, i32
  }
  func.func @transform_4(%arg0: i32) -> (i32, i32) {
    %c0_i32 = arith.constant 0 : i32
    %c0_i32_0 = arith.constant 0 : i32
    %c0_i32_1 = arith.constant 0 : i32
    return %c0_i32, %c0_i32_0 : i32, i32
  }
  func.func @transform_5(%arg0: i32) -> (i32, i32) {
    %c0_i32 = arith.constant 0 : i32
    %c0_i32_0 = arith.constant 0 : i32
    %c0_i32_1 = arith.constant 0 : i32
    return %c0_i32, %c0_i32_0 : i32, i32
  }
  func.func @transform_6(%arg0: i32) -> (i32, i32) {
    %c0_i32 = arith.constant 0 : i32
    %c0_i32_0 = arith.constant 0 : i32
    %c0_i32_1 = arith.constant 0 : i32
    return %c0_i32, %c0_i32_0 : i32, i32
  }
  func.func @transform_7(%arg0: i32) -> (i32, i32) {
    %c0_i32 = arith.constant 0 : i32
    %c0_i32_0 = arith.constant 0 : i32
    %c0_i32_1 = arith.constant 0 : i32
    return %c0_i32, %c0_i32_0 : i32, i32
  }
  func.func @transform_8(%arg0: i32) -> (i32, i32) {
    %c0_i32 = arith.constant 0 : i32
    %c0_i32_0 = arith.constant 0 : i32
    %c0_i32_1 = arith.constant 0 : i32
    return %c0_i32, %c0_i32_0 : i32, i32
  }
  func.func @transform_9(%arg0: i32) -> (i32, i32) {
    %c0_i32 = arith.constant 0 : i32
    %c0_i32_0 = arith.constant 0 : i32
    %c0_i32_1 = arith.constant 0 : i32
    return %c0_i32, %c0_i32_0 : i32, i32
  }
  func.func @transform_10(%arg0: i32) -> (i32, i32) {
    %c0_i32 = arith.constant 0 : i32
    %c0_i32_0 = arith.constant 0 : i32
    %c0_i32_1 = arith.constant 0 : i32
    return %c0_i32, %c0_i32_0 : i32, i32
  }
  func.func @transform_11(%arg0: i32) -> (i32, i32) {
    %c0_i32 = arith.constant 0 : i32
    %c0_i32_0 = arith.constant 0 : i32
    return %arg0, %c0_i32 : i32, i32
  }
  func.func @transform_12(%arg0: i32) -> (i32, i32) {
    %c0_i32 = arith.constant 0 : i32
    %c0_i32_0 = arith.constant 0 : i32
    return %arg0, %c0_i32 : i32, i32
  }
}

</mosaic_0001>

<llo_original>
// kernel: network_forward.1
$region0: #{network_forward.1}
  #allocation0 [shape = 'u32[]', space=smem, size = 0x4, offset = 0x4, fixed_abs, tag = 'smem constant byte address 0x4 - core index']
  #allocation1 [shape = 'u32[144,128]{1,0:T(1,128)}', space=vmem, size = 0x12000, scoped, tag = 'internal scratch']
  #allocation2 [shape = 'f32[8,16]{1,0:T(8,128)}', space=vmem, size = 0x1000, scoped, tag = 'scratch operand']
  %s0 = inlined_call_operand.vmem [shape: bf16[16,256,48], index: 0, kind: input, shape index: {}]
  %s1 = inlined_call_operand.vmem [shape: bf16[48,16], index: 1, kind: input, shape index: {}]
  %s2 = inlined_call_operand.vmem [shape: f32[1,16], index: 2, kind: input, shape index: {}]
  %s3 = inlined_call_operand.vmem [shape: bf16[16,32], index: 3, kind: input, shape index: {}]
  %s4 = inlined_call_operand.vmem [shape: f32[1,32], index: 4, kind: input, shape index: {}]
  %s5 = inlined_call_operand.vmem [shape: bf16[32,128], index: 5, kind: input, shape index: {}]
  %s6 = inlined_call_operand.vmem [shape: f32[1,128], index: 6, kind: input, shape index: {}]
  %s7 = inlined_call_operand.vmem [shape: bf16[16,32], index: 7, kind: input, shape index: {}]
  %s8 = inlined_call_operand.vmem [shape: f32[1,32], index: 8, kind: input, shape index: {}]
  %s9 = inlined_call_operand.vmem [shape: bf16[32,128], index: 9, kind: input, shape index: {}]
  %s10 = inlined_call_operand.vmem [shape: f32[1,128], index: 10, kind: input, shape index: {}]
  %s11 = inlined_call_operand.vmem [shape: f32[16,128], index: 11, kind: output, shape index: {0}]
  %s12 = inlined_call_operand.vmem [shape: f32[16,128], index: 12, kind: output, shape index: {1}]
  %13 = xla_tuple %s11, %s12
  %s14 = sld [smem:[#allocation0]]
  $region92: #{network_forward.1} parent=0
    _
  %s16 = ssub.s32 1, %s14
  %s17 = scalar_select 0, %s16, %s14
  loop: start=0, step=1, limit=4
  $region2: #{network_forward.1} parent=0 // loop_pre_header
    _
  $region3: #{network_forward.1} parent=0 // loop_header
    %s19 = sphi 0, %s23
    %p20 = scmp.ge.s32.totalorder %s19, 4
    %s29 = sphi 0, %s31
    %s32 = sphi 0, %s29
    %s33 = sphi 0, %s32
    %s49 = sphi 0, %s33
    %s53 = sphi 0, %s53
    %s55 = sphi 0, %s53
    %s56 = sphi 0, %s55
    %s70 = sphi 0, %s56
    %s74 = sphi 0, %s74
    %s76 = sphi 0, %s74
    %s77 = sphi 0, %s76
    %s91 = sphi 0, %s77
    %s95 = sphi 0, %s95
    %s97 = sphi 0, %s95
    %s98 = sphi 0, %s97
    %s112 = sphi 0, %s98
    %s116 = sphi 0, %s116
    %s118 = sphi 0, %s116
    %s119 = sphi 0, %s118
    %s133 = sphi 0, %s119
    %s137 = sphi 0, %s137
    %s139 = sphi 0, %s137
    %s140 = sphi 0, %s139
    %s154 = sphi 0, %s140
    %s158 = sphi 0, %s158
    %s160 = sphi 0, %s158
    %s161 = sphi 0, %s160
    %s175 = sphi 0, %s161
    %s179 = sphi 0, %s179
    %s181 = sphi 0, %s179
    %s182 = sphi 0, %s181
    %s196 = sphi 0, %s182
    %s200 = sphi 0, %s200
    %s202 = sphi 0, %s200
    %s203 = sphi 0, %s202
    %s217 = sphi 0, %s203
    %s221 = sphi 0, %s221
    %s223 = sphi 0, %s221
    %s224 = sphi 0, %s223
    %s238 = sphi 0, %s224
    %s242 = sphi 0, %s242
    %s244 = sphi 0, %s242
    %s245 = sphi 0, %s244
    %s259 = sphi 0, %s245
    %s265 = sphi 0, %s267
    %s268 = sphi 0, %s265
    %s269 = sphi 0, %s268
    %s285 = sphi 0, %s269
    %s291 = sphi 0, %s293
    %s294 = sphi 0, %s291
    %s295 = sphi 0, %s294
    %s311 = sphi 0, %s295
  $region4: #{network_forward.1} parent=0 // loop_header_branch
    %22 = sbr.rel (%p20) target = $region8
  $region5: #{network_forward.1} parent=0 // loop_body
    %s24 = ssub.s32 %s19, 1
    %s25 = ssub.s32 %s19, 2
    %s26 = sadd.s32 %s19, 1
    %s27 = ssub.s32 %s19, %s26
    %p28 = scmp.eq.s32.totalorder %s27, 0
    %s30 = sadd.s32 %s29, 1
    %s31 = scalar_select %p28, %s29, %s30
    %p34 = pneg %p28
    %p35 = scmp.eq.s32.totalorder %s19, 1
    %p36 = por %p34, %p35
    %p37 = scmp.ne.s32.totalorder %s29, %s32
    %p38 = scmp.eq.s32.totalorder %s19, 0
    %p39 = por %p37, %p38
    %p40 = scmp.ne.s32.totalorder %s29, %s32
    %p41 = scmp.eq.s32.totalorder %s24, 1
    %p42 = por %p40, %p41
    %p43 = scmp.ne.s32.totalorder %s32, %s33
    %p44 = scmp.eq.s32.totalorder %s24, 0
    %p45 = por %p43, %p44
    %p46 = scmp.ne.s32.totalorder %s32, %s33
    %p47 = scmp.eq.s32.totalorder %s25, 1
    %p48 = por %p46, %p47
    %p50 = scmp.ne.s32.totalorder %s33, %s49
    %p51 = scmp.eq.s32.totalorder %s25, 0
    %p52 = por %p50, %p51
    %s54 = sadd.s32 %s53, 1
    %p57 = scmp.eq.s32.totalorder %s19, 1
    %p58 = scmp.ne.s32.totalorder %s53, %s55
    %p59 = scmp.eq.s32.totalorder %s19, 0
    %p60 = por %p58, %p59
    %p61 = scmp.ne.s32.totalorder %s53, %s55
    %p62 = scmp.eq.s32.totalorder %s24, 1
    %p63 = por %p61, %p62
    %p64 = scmp.ne.s32.totalorder %s55, %s56
    %p65 = scmp.eq.s32.totalorder %s24, 0
    %p66 = por %p64, %p65
    %p67 = scmp.ne.s32.totalorder %s55, %s56
    %p68 = scmp.eq.s32.totalorder %s25, 1
    %p69 = por %p67, %p68
    %p71 = scmp.ne.s32.totalorder %s56, %s70
    %p72 = scmp.eq.s32.totalorder %s25, 0
    %p73 = por %p71, %p72
    %s75 = sadd.s32 %s74, 1
    %p78 = scmp.eq.s32.totalorder %s19, 1
    %p79 = scmp.ne.s32.totalorder %s74, %s76
    %p80 = scmp.eq.s32.totalorder %s19, 0
    %p81 = por %p79, %p80
    %p82 = scmp.ne.s32.totalorder %s74, %s76
    %p83 = scmp.eq.s32.totalorder %s24, 1
    %p84 = por %p82, %p83
    %p85 = scmp.ne.s32.totalorder %s76, %s77
    %p86 = scmp.eq.s32.totalorder %s24, 0
    %p87 = por %p85, %p86
    %p88 = scmp.ne.s32.totalorder %s76, %s77
    %p89 = scmp.eq.s32.totalorder %s25, 1
    %p90 = por %p88, %p89
    %p92 = scmp.ne.s32.totalorder %s77, %s91
    %p93 = scmp.eq.s32.totalorder %s25, 0
    %p94 = por %p92, %p93
    %s96 = sadd.s32 %s95, 1
    %p99 = scmp.eq.s32.totalorder %s19, 1
    %p100 = scmp.ne.s32.totalorder %s95, %s97
    %p101 = scmp.eq.s32.totalorder %s19, 0
    %p102 = por %p100, %p101
    %p103 = scmp.ne.s32.totalorder %s95, %s97
    %p104 = scmp.eq.s32.totalorder %s24, 1
    %p105 = por %p103, %p104
    %p106 = scmp.ne.s32.totalorder %s97, %s98
    %p107 = scmp.eq.s32.totalorder %s24, 0
    %p108 = por %p106, %p107
    %p109 = scmp.ne.s32.totalorder %s97, %s98
    %p110 = scmp.eq.s32.totalorder %s25, 1
    %p111 = por %p109, %p110
    %p113 = scmp.ne.s32.totalorder %s98, %s112
    %p114 = scmp.eq.s32.totalorder %s25, 0
    %p115 = por %p113, %p114
    %s117 = sadd.s32 %s116, 1
    %p120 = scmp.eq.s32.totalorder %s19, 1
    %p121 = scmp.ne.s32.totalorder %s116, %s118
    %p122 = scmp.eq.s32.totalorder %s19, 0
    %p123 = por %p121, %p122
    %p124 = scmp.ne.s32.totalorder %s116, %s118
    %p125 = scmp.eq.s32.totalorder %s24, 1
    %p126 = por %p124, %p125
    %p127 = scmp.ne.s32.totalorder %s118, %s119
    %p128 = scmp.eq.s32.totalorder %s24, 0
    %p129 = por %p127, %p128
    %p130 = scmp.ne.s32.totalorder %s118, %s119
    %p131 = scmp.eq.s32.totalorder %s25, 1
    %p132 = por %p130, %p131
    %p134 = scmp.ne.s32.totalorder %s119, %s133
    %p135 = scmp.eq.s32.totalorder %s25, 0
    %p136 = por %p134, %p135
    %s138 = sadd.s32 %s137, 1
    %p141 = scmp.eq.s32.totalorder %s19, 1
    %p142 = scmp.ne.s32.totalorder %s137, %s139
    %p143 = scmp.eq.s32.totalorder %s19, 0
    %p144 = por %p142, %p143
    %p145 = scmp.ne.s32.totalorder %s137, %s139
    %p146 = scmp.eq.s32.totalorder %s24, 1
    %p147 = por %p145, %p146
    %p148 = scmp.ne.s32.totalorder %s139, %s140
    %p149 = scmp.eq.s32.totalorder %s24, 0
    %p150 = por %p148, %p149
    %p151 = scmp.ne.s32.totalorder %s139, %s140
    %p152 = scmp.eq.s32.totalorder %s25, 1
    %p153 = por %p151, %p152
    %p155 = scmp.ne.s32.totalorder %s140, %s154
    %p156 = scmp.eq.s32.totalorder %s25, 0
    %p157 = por %p155, %p156
    %s159 = sadd.s32 %s158, 1
    %p162 = scmp.eq.s32.totalorder %s19, 1
    %p163 = scmp.ne.s32.totalorder %s158, %s160
    %p164 = scmp.eq.s32.totalorder %s19, 0
    %p165 = por %p163, %p164
    %p166 = scmp.ne.s32.totalorder %s158, %s160
    %p167 = scmp.eq.s32.totalorder %s24, 1
    %p168 = por %p166, %p167
    %p169 = scmp.ne.s32.totalorder %s160, %s161
    %p170 = scmp.eq.s32.totalorder %s24, 0
    %p171 = por %p169, %p170
    %p172 = scmp.ne.s32.totalorder %s160, %s161
    %p173 = scmp.eq.s32.totalorder %s25, 1
    %p174 = por %p172, %p173
    %p176 = scmp.ne.s32.totalorder %s161, %s175
    %p177 = scmp.eq.s32.totalorder %s25, 0
    %p178 = por %p176, %p177
    %s180 = sadd.s32 %s179, 1
    %p183 = scmp.eq.s32.totalorder %s19, 1
    %p184 = scmp.ne.s32.totalorder %s179, %s181
    %p185 = scmp.eq.s32.totalorder %s19, 0
    %p186 = por %p184, %p185
    %p187 = scmp.ne.s32.totalorder %s179, %s181
    %p188 = scmp.eq.s32.totalorder %s24, 1
    %p189 = por %p187, %p188
    %p190 = scmp.ne.s32.totalorder %s181, %s182
    %p191 = scmp.eq.s32.totalorder %s24, 0
    %p192 = por %p190, %p191
    %p193 = scmp.ne.s32.totalorder %s181, %s182
    %p194 = scmp.eq.s32.totalorder %s25, 1
    %p195 = por %p193, %p194
    %p197 = scmp.ne.s32.totalorder %s182, %s196
    %p198 = scmp.eq.s32.totalorder %s25, 0
    %p199 = por %p197, %p198
    %s201 = sadd.s32 %s200, 1
    %p204 = scmp.eq.s32.totalorder %s19, 1
    %p205 = scmp.ne.s32.totalorder %s200, %s202
    %p206 = scmp.eq.s32.totalorder %s19, 0
    %p207 = por %p205, %p206
    %p208 = scmp.ne.s32.totalorder %s200, %s202
    %p209 = scmp.eq.s32.totalorder %s24, 1
    %p210 = por %p208, %p209
    %p211 = scmp.ne.s32.totalorder %s202, %s203
    %p212 = scmp.eq.s32.totalorder %s24, 0
    %p213 = por %p211, %p212
    %p214 = scmp.ne.s32.totalorder %s202, %s203
    %p215 = scmp.eq.s32.totalorder %s25, 1
    %p216 = por %p214, %p215
    %p218 = scmp.ne.s32.totalorder %s203, %s217
    %p219 = scmp.eq.s32.totalorder %s25, 0
    %p220 = por %p218, %p219
    %s222 = sadd.s32 %s221, 1
    %p225 = scmp.eq.s32.totalorder %s19, 1
    %p226 = scmp.ne.s32.totalorder %s221, %s223
    %p227 = scmp.eq.s32.totalorder %s19, 0
    %p228 = por %p226, %p227
    %p229 = scmp.ne.s32.totalorder %s221, %s223
    %p230 = scmp.eq.s32.totalorder %s24, 1
    %p231 = por %p229, %p230
    %p232 = scmp.ne.s32.totalorder %s223, %s224
    %p233 = scmp.eq.s32.totalorder %s24, 0
    %p234 = por %p232, %p233
    %p235 = scmp.ne.s32.totalorder %s223, %s224
    %p236 = scmp.eq.s32.totalorder %s25, 1
    %p237 = por %p235, %p236
    %p239 = scmp.ne.s32.totalorder %s224, %s238
    %p240 = scmp.eq.s32.totalorder %s25, 0
    %p241 = por %p239, %p240
    %s243 = sadd.s32 %s242, 1
    %p246 = scmp.eq.s32.totalorder %s19, 1
    %p247 = scmp.ne.s32.totalorder %s242, %s244
    %p248 = scmp.eq.s32.totalorder %s19, 0
    %p249 = por %p247, %p248
    %p250 = scmp.ne.s32.totalorder %s242, %s244
    %p251 = scmp.eq.s32.totalorder %s24, 1
    %p252 = por %p250, %p251
    %p253 = scmp.ne.s32.totalorder %s244, %s245
    %p254 = scmp.eq.s32.totalorder %s24, 0
    %p255 = por %p253, %p254
    %p256 = scmp.ne.s32.totalorder %s244, %s245
    %p257 = scmp.eq.s32.totalorder %s25, 1
    %p258 = por %p256, %p257
    %p260 = scmp.ne.s32.totalorder %s245, %s259
    %p261 = scmp.eq.s32.totalorder %s25, 0
    %p262 = por %p260, %p261
    %s263 = ssub.s32 %s19, %s26
    %p264 = scmp.eq.s32.totalorder %s263, 0
    %s266 = sadd.s32 %s265, 1
    %s267 = scalar_select %p264, %s265, %s266
    %p270 = pneg %p264
    %p271 = scmp.eq.s32.totalorder %s19, 1
    %p272 = por %p270, %p271
    %p273 = scmp.ne.s32.totalorder %s265, %s268
    %p274 = scmp.eq.s32.totalorder %s19, 0
    %p275 = por %p273, %p274
    %p276 = scmp.ne.s32.totalorder %s265, %s268
    %p277 = scmp.eq.s32.totalorder %s24, 1
    %p278 = por %p276, %p277
    %p279 = scmp.ne.s32.totalorder %s268, %s269
    %p280 = scmp.eq.s32.totalorder %s24, 0
    %p281 = por %p279, %p280
    %p282 = scmp.ne.s32.totalorder %s268, %s269
    %p283 = scmp.eq.s32.totalorder %s25, 1
    %p284 = por %p282, %p283
    %p286 = scmp.ne.s32.totalorder %s269, %s285
    %p287 = scmp.eq.s32.totalorder %s25, 0
    %p288 = por %p286, %p287
    %s289 = ssub.s32 %s19, %s26
    %p290 = scmp.eq.s32.totalorder %s289, 0
    %s292 = sadd.s32 %s291, 1
    %s293 = scalar_select %p290, %s291, %s292
    %p296 = pneg %p290
    %p297 = scmp.eq.s32.totalorder %s19, 1
    %p298 = por %p296, %p297
    %p299 = scmp.ne.s32.totalorder %s291, %s294
    %p300 = scmp.eq.s32.totalorder %s19, 0
    %p301 = por %p299, %p300
    %p302 = scmp.ne.s32.totalorder %s291, %s294
    %p303 = scmp.eq.s32.totalorder %s24, 1
    %p304 = por %p302, %p303
    %p305 = scmp.ne.s32.totalorder %s294, %s295
    %p306 = scmp.eq.s32.totalorder %s24, 0
    %p307 = por %p305, %p306
    %p308 = scmp.ne.s32.totalorder %s294, %s295
    %p309 = scmp.eq.s32.totalorder %s25, 1
    %p310 = por %p308, %p309
    %p312 = scmp.ne.s32.totalorder %s295, %s311
    %p313 = scmp.eq.s32.totalorder %s25, 0
    %p314 = por %p312, %p313
    %p315 = scmp.le.s32.totalorder 1, %s19
    %p316 = scmp.lt.s32.totalorder %s19, 3
    %p317 = pnand %p315, %p316
    %p318 = pneg %p317
    // Predicated region
    $region9: #{network_forward.1} parent=5 // pred_check
      _
    $region10: #{network_forward.1} parent=5 // pred_check_branch
      %320 = sbr.rel (%p317) target = $region12
    $region11: #{network_forward.1} parent=5 // pred_region
      %s321 = ssub.s32 %s19, 1
      // Predicated region
      $region13: #{network_forward.1} parent=11 // pred_check
        %p322 = pneg %p66
      $region14: #{network_forward.1} parent=11 // pred_check_branch
        %324 = sbr.rel (%p322) target = $region16
      $region15: #{network_forward.1} parent=11 // pred_region
        _
      $region16: #{network_forward.1} parent=11 // pred_fallthru
        _
      // Predicated region
      $region17: #{network_forward.1} parent=11 // pred_check
        %p325 = pneg %p87
      $region18: #{network_forward.1} parent=11 // pred_check_branch
        %327 = sbr.rel (%p325) target = $region20
      $region19: #{network_forward.1} parent=11 // pred_region
        _
      $region20: #{network_forward.1} parent=11 // pred_fallthru
        _
      // Predicated region
      $region21: #{network_forward.1} parent=11 // pred_check
        %p328 = pneg %p108
      $region22: #{network_forward.1} parent=11 // pred_check_branch
        %330 = sbr.rel (%p328) target = $region24
      $region23: #{network_forward.1} parent=11 // pred_region
        _
      $region24: #{network_forward.1} parent=11 // pred_fallthru
        _
      // Predicated region
      $region25: #{network_forward.1} parent=11 // pred_check
        %p331 = pneg %p129
      $region26: #{network_forward.1} parent=11 // pred_check_branch
        %333 = sbr.rel (%p331) target = $region28
      $region27: #{network_forward.1} parent=11 // pred_region
        _
      $region28: #{network_forward.1} parent=11 // pred_fallthru
        _
      // Predicated region
      $region29: #{network_forward.1} parent=11 // pred_check
        %p334 = pneg %p150
      $region30: #{network_forward.1} parent=11 // pred_check_branch
        %336 = sbr.rel (%p334) target = $region32
      $region31: #{network_forward.1} parent=11 // pred_region
        _
      $region32: #{network_forward.1} parent=11 // pred_fallthru
        _
      // Predicated region
      $region33: #{network_forward.1} parent=11 // pred_check
        %p337 = pneg %p171
      $region34: #{network_forward.1} parent=11 // pred_check_branch
        %339 = sbr.rel (%p337) target = $region36
      $region35: #{network_forward.1} parent=11 // pred_region
        _
      $region36: #{network_forward.1} parent=11 // pred_fallthru
        _
      // Predicated region
      $region37: #{network_forward.1} parent=11 // pred_check
        %p340 = pneg %p192
      $region38: #{network_forward.1} parent=11 // pred_check_branch
        %342 = sbr.rel (%p340) target = $region40
      $region39: #{network_forward.1} parent=11 // pred_region
        _
      $region40: #{network_forward.1} parent=11 // pred_fallthru
        _
      // Predicated region
      $region41: #{network_forward.1} parent=11 // pred_check
        %p343 = pneg %p213
      $region42: #{network_forward.1} parent=11 // pred_check_branch
        %345 = sbr.rel (%p343) target = $region44
      $region43: #{network_forward.1} parent=11 // pred_region
        _
      $region44: #{network_forward.1} parent=11 // pred_fallthru
        _
      // Predicated region
      $region45: #{network_forward.1} parent=11 // pred_check
        %p346 = pneg %p234
      $region46: #{network_forward.1} parent=11 // pred_check_branch
        %348 = sbr.rel (%p346) target = $region48
      $region47: #{network_forward.1} parent=11 // pred_region
        _
      $region48: #{network_forward.1} parent=11 // pred_fallthru
        _
      // Predicated region
      $region49: #{network_forward.1} parent=11 // pred_check
        %p349 = pneg %p255
      $region50: #{network_forward.1} parent=11 // pred_check_branch
        %351 = sbr.rel (%p349) target = $region52
      $region51: #{network_forward.1} parent=11 // pred_region
        _
      $region52: #{network_forward.1} parent=11 // pred_fallthru
        _
    $region12: #{network_forward.1} parent=5 // pred_fallthru
      _
    %p352 = scmp.lt.s32.totalorder %s19, 2
    // Predicated region
    $region53: #{network_forward.1} parent=5 // pred_check
      %p353 = pneg %p352
    $region54: #{network_forward.1} parent=5 // pred_check_branch
      %355 = sbr.rel (%p353) target = $region56
    $region55: #{network_forward.1} parent=5 // pred_region
      // Predicated region
      $region57: #{network_forward.1} parent=55 // pred_check
        %p356 = pneg %p39
      $region58: #{network_forward.1} parent=55 // pred_check_branch
        %358 = sbr.rel (%p356) target = $region60
      $region59: #{network_forward.1} parent=55 // pred_region
        %s359 = smul.u32 8, %s19
        %p360 = scmp.lt.s32.totalorder %s359, 15
        %s361 = scalar_select %p360, %s359, 15
        %s362 = smul.addr %s361, 32
        %s363 = smul.addr %s362, 4
        %s364 = scalar_lea.vmem %s0, %s363
        %s365 = smul.u32 8, %s19
      $region60: #{network_forward.1} parent=55 // pred_fallthru
        _
    $region56: #{network_forward.1} parent=5 // pred_fallthru
      _
    %p366 = scmp.le.s32.totalorder 1, %s19
    %p367 = scmp.lt.s32.totalorder %s19, 3
    %p368 = pnand %p366, %p367
    %p369 = pneg %p368
    // Predicated region
    $region61: #{network_forward.1} parent=5 // pred_check
      _
    $region62: #{network_forward.1} parent=5 // pred_check_branch
      %371 = sbr.rel (%p368) target = $region64
    $region63: #{network_forward.1} parent=5 // pred_region
      %s372 = ssub.s32 %s19, 1
      %s373 = smul.u32 8, %s24
      %p374 = scmp.lt.s32.totalorder %s373, 15
      %s375 = scalar_select %p374, %s373, 15
      %s376 = smul.addr %s375, 32
      %s377 = smul.addr %s376, 4
      %s378 = scalar_lea.vmem %s0, %s377
      %p379 = pneg %p45
      %p380 = pneg %p42
      %p381 = pneg %p66
      %p382 = pneg %p63
      %p383 = pneg %p87
      %p384 = pneg %p84
      %p385 = pneg %p108
      %p386 = pneg %p105
      %p387 = pneg %p129
      %p388 = pneg %p126
      %p389 = pneg %p150
      %p390 = pneg %p147
      %p391 = pneg %p171
      %p392 = pneg %p168
      %p393 = pneg %p192
      %p394 = pneg %p189
      %p395 = pneg %p213
      %p396 = pneg %p210
      %p397 = pneg %p234
      %p398 = pneg %p231
      %p399 = pneg %p255
      %p400 = pneg %p252
      %p401 = pneg %p281
      %p402 = pneg %p278
      %p403 = scmp.lt.s32.totalorder %s24, 1
      %s404 = scalar_select %p403, %s24, 1
      %s405 = smul.addr %s404, 8
      %s406 = scalar_lea.vmem %s11, %s405
      %p407 = pneg %p307
      %p408 = pneg %p304
      %p409 = scmp.lt.s32.totalorder %s24, 1
      %s410 = scalar_select %p409, %s24, 1
      %s411 = smul.addr %s410, 8
      %s412 = scalar_lea.vmem %s12, %s411
      %s413 = smul.u32 8, %s24
      %p414 = scmp.lt.s32.totalorder %s413, 15
      %s415 = scalar_select %p414, %s413, 15
      %s416 = smul.addr %s415, 32
      %s417 = smul.addr %s416, 4
      %s418 = scalar_lea.vmem %s0, %s417
      %s419 = smul.u32 8, %s24
      %p420 = scmp.lt.s32.totalorder %s24, 1
      %s421 = scalar_select %p420, %s24, 1
      %s422 = smul.addr %s421, 8
      %s423 = scalar_lea.vmem %s11, %s422
      %p424 = scmp.lt.s32.totalorder %s24, 1
      %s425 = scalar_select %p424, %s24, 1
      %s426 = smul.addr %s425, 8
      %s427 = scalar_lea.vmem %s12, %s426
      loop: start=0, step=1, limit=8
      $region65: #{network_forward.1} parent=63 // loop_pre_header
        _
      $region66: #{network_forward.1} parent=63 // loop_header
        %s430 = sphi 0, %s434
        %p431 = scmp.ge.s32.totalorder %s430, 8
      $region67: #{network_forward.1} parent=63 // loop_header_branch
        %433 = sbr.rel (%p431) target = $region71
      $region68: #{network_forward.1} parent=63 // loop_body
        %s435 = smul.u32 %s430, 32
        %s436 = smul.addr %s435, 4
        %s437 = scalar_lea.vmem %s418, %s436
        %v438 = vld [vmem:[%s437] sm:$0xf]
        %v439 = vld [vmem:[%s437 + $0x4] sm:$0xf]
        %v440 = vld [vmem:[%s437 + $0x8] sm:$0xf]
        %v441 = vld [vmem:[%s437 + $0xc] sm:$0xf]
        %v442 = vld [vmem:[%s437 + $0x10] sm:$0xf]
        %v443 = vld [vmem:[%s437 + $0x14] sm:$0xf]
        %v444 = vld [vmem:[%s437 + $0x18] sm:$0xf]
        %v445 = vld [vmem:[%s437 + $0x1c] sm:$0xf]
        %v446 = vld [vmem:[%s437 + $0x20] sm:$0xf]
        %v447 = vld [vmem:[%s437 + $0x24] sm:$0xf]
        %v448 = vld [vmem:[%s437 + $0x28] sm:$0xf]
        %v449 = vld [vmem:[%s437 + $0x2c] sm:$0xf]
        %v450 = vld [vmem:[%s437 + $0x30] sm:$0xf]
        %v451 = vld [vmem:[%s437 + $0x34] sm:$0xf]
        %v452 = vld [vmem:[%s437 + $0x38] sm:$0xf]
        %v453 = vld [vmem:[%s437 + $0x3c] sm:$0xf]
        %v454 = vld [vmem:[%s437 + $0x40] sm:$0xf]
        %v455 = vld [vmem:[%s437 + $0x44] sm:$0xf]
        %v456 = vld [vmem:[%s437 + $0x48] sm:$0xf]
        %v457 = vld [vmem:[%s437 + $0x4c] sm:$0xf]
        %v458 = vld [vmem:[%s437 + $0x50] sm:$0xf]
        %v459 = vld [vmem:[%s437 + $0x54] sm:$0xf]
        %v460 = vld [vmem:[%s437 + $0x58] sm:$0xf]
        %v461 = vld [vmem:[%s437 + $0x5c] sm:$0xf]
        %v462 = vld [vmem:[%s437 + $0x60] sm:$0xf]
        %v463 = vld [vmem:[%s437 + $0x64] sm:$0xf]
        %v464 = vld [vmem:[%s437 + $0x68] sm:$0xf]
        %v465 = vld [vmem:[%s437 + $0x6c] sm:$0xf]
        %v466 = vld [vmem:[%s437 + $0x70] sm:$0xf]
        %v467 = vld [vmem:[%s437 + $0x74] sm:$0xf]
        %v468 = vld [vmem:[%s437 + $0x78] sm:$0xf]
        %v469 = vld [vmem:[%s437 + $0x7c] sm:$0xf]
        %v470 = vld [vmem:[%s1] sm:$0xf]
        %v471 = vld [vmem:[%s1 + $0x4] sm:$0xf]
        %v472 = vld [vmem:[%s1 + $0x8] sm:$0xf]
        %v473 = vld [vmem:[%s1 + $0xc] sm:$0xf]
        %v474 = vld [vmem:[%s1 + $0x10] sm:$0xf]
        %v475 = vld [vmem:[%s1 + $0x14] sm:$0xf]
        %v476 = vld [vmem:[%s2] sm:$0x1]
        %v478 = vlaneseq
        %v479 = vshrl.u32 %v478, 7
        %v480 = vsub.s32 0, %v479
        %v481 = vrot.slane %v476, %v480
        %v515 = vunpack.c.l.b16 %v438
        %v516 = vunpack.c.l.b16 %v439
        %v517 = vunpack.c.l.b16 %v440
        %v518 = vunpack.c.l.b16 %v441
        %v519 = vunpack.c.l.b16 %v442
        %v520 = vunpack.c.l.b16 %v443
        %v521 = vunpack.c.l.b16 %v444
        %v522 = vunpack.c.l.b16 %v445
        %v523 = vunpack.c.l.b16 %v446
        %v524 = vunpack.c.l.b16 %v447
        %v525 = vunpack.c.l.b16 %v448
        %v526 = vunpack.c.l.b16 %v449
        %v527 = vunpack.c.l.b16 %v450
        %v528 = vunpack.c.l.b16 %v451
        %v529 = vunpack.c.l.b16 %v452
        %v530 = vunpack.c.l.b16 %v453
        %v531 = vunpack.c.l.b16 %v454
        %v532 = vunpack.c.l.b16 %v455
        %v533 = vunpack.c.l.b16 %v456
        %v534 = vunpack.c.l.b16 %v457
        %v535 = vunpack.c.l.b16 %v458
        %v536 = vunpack.c.l.b16 %v459
        %v537 = vunpack.c.l.b16 %v460
        %v538 = vunpack.c.l.b16 %v461
        %v539 = vunpack.c.l.b16 %v462
        %v540 = vunpack.c.l.b16 %v463
        %v541 = vunpack.c.l.b16 %v464
        %v542 = vunpack.c.l.b16 %v465
        %v543 = vunpack.c.l.b16 %v466
        %v544 = vunpack.c.l.b16 %v467
        %v545 = vunpack.c.l.b16 %v468
        %v546 = vunpack.c.l.b16 %v469
        %v547 = vpack.c.b16 %v516, %v515
        %v548 = vpack.c.b16 %v518, %v517
        %v549 = vpack.c.b16 %v520, %v519
        %v550 = vpack.c.b16 %v522, %v521
        %v551 = vpack.c.b16 %v524, %v523
        %v552 = vpack.c.b16 %v526, %v525
        %v553 = vpack.c.b16 %v528, %v527
        %v554 = vpack.c.b16 %v530, %v529
        %v555 = vpack.c.b16 %v532, %v531
        %v556 = vpack.c.b16 %v534, %v533
        %v557 = vpack.c.b16 %v536, %v535
        %v558 = vpack.c.b16 %v538, %v537
        %v559 = vpack.c.b16 %v540, %v539
        %v560 = vpack.c.b16 %v542, %v541
        %v561 = vpack.c.b16 %v544, %v543
        %v562 = vpack.c.b16 %v546, %v545
        %v569 = vunpack.c.l.b16 %v470
        %v570 = vunpack.c.l.b16 %v471
        %v571 = vunpack.c.l.b16 %v472
        %v572 = vunpack.c.l.b16 %v473
        %v573 = vunpack.c.l.b16 %v474
        %v574 = vunpack.c.l.b16 %v475
        %v575 = vpack.c.b16 %v570, %v569
        %v576 = vpack.c.b16 %v572, %v571
        %v577 = vpack.c.b16 %v574, %v573
        %vm581 = vcmask 392192
        %v583 = vsel %vm581, %v547, 0
        %v586 = vsel %vm581, %v548, 0
        %v589 = vsel %vm581, %v549, 0
        %v592 = vsel %vm581, %v550, 0
        %v595 = vsel %vm581, %v551, 0
        %v598 = vsel %vm581, %v552, 0
        %v601 = vsel %vm581, %v553, 0
        %v604 = vsel %vm581, %v554, 0
        %v607 = vsel %vm581, %v555, 0
        %v610 = vsel %vm581, %v556, 0
        %v613 = vsel %vm581, %v557, 0
        %v616 = vsel %vm581, %v558, 0
        %v619 = vsel %vm581, %v559, 0
        %v622 = vsel %vm581, %v560, 0
        %v625 = vsel %vm581, %v561, 0
        %v628 = vsel %vm581, %v562, 0
        %630 = vmatprep.subr.bf16.mxu0 0
        %631 = vmatpush1.bf16.msra.mxu0 0
        %632 = vmatprep.subr.bf16.mxu0 0
        %633 = vmatpush1.bf16.msra.mxu0 0
        %634 = vmatprep.subr.bf16.mxu0 0
        %635 = vmatpush1.bf16.msra.mxu0 0
        %636 = vmatprep.subr.bf16.mxu0 0
        %637 = vmatpush1.bf16.msra.mxu0 0
        %638 = vmatprep.subr.bf16.mxu0 0
        %639 = vmatpush1.bf16.msra.mxu0 0
        %640 = vmatprep.subr.bf16.mxu0 0
        %641 = vmatpush1.bf16.msra.mxu0 %v577
        %642 = vmatprep.subr.bf16.mxu0 0
        %643 = vmatpush1.bf16.msra.mxu0 %v576
        %644 = vmatprep.subr.bf16.mxu0 0
        %645 = vmatpush1.bf16.msra.mxu0 %v575
        %646 = vmatprep.subr.bf16.mxu0 0
        %647 = vmatpush2.bf16.msra.mxu0 0
        %648 = vmatprep.subr.bf16.mxu0 0
        %649 = vmatpush2.bf16.msra.mxu0 0
        %650 = vmatprep.subr.bf16.mxu0 0
        %651 = vmatpush2.bf16.msra.mxu0 0
        %652 = vmatprep.subr.bf16.mxu0 0
        %653 = vmatpush2.bf16.msra.mxu0 0
        %654 = vmatprep.subr.bf16.mxu0 0
        %655 = vmatpush2.bf16.msra.mxu0 0
        %656 = vmatprep.subr.bf16.mxu0 0
        %657 = vmatpush2.bf16.msra.mxu0 0
        %658 = vmatprep.subr.bf16.mxu0 0
        %659 = vmatpush2.bf16.msra.mxu0 0
        %660 = vmatprep.subr.bf16.mxu0 0
        %661 = vmatpush2.bf16.msra.mxu0 0
        %662 = vmatprep.mubr.bf16.mxu0 0
        %663 = vmatmul.mubr.bf16.gmra.mxu0 %v583
        %v664 = vpop.f32.mrf.mxu0
        %v665 = vadd.f32 %v481, %v664
        %v666 = vpop.f32.mrf.mxu0
        %v667 = vpop.f32.mrf.mxu0
        %v668 = vadd.f32 %v481, %v667
        %v669 = vpop.f32.mrf.mxu0
        %670 = vmatprep.mubr.bf16.mxu0 0
        %671 = vmatmul.mubr.bf16.gmra.mxu0 %v586
        %v672 = vpop.f32.mrf.mxu0
        %v673 = vadd.f32 %v481, %v672
        %v674 = vpop.f32.mrf.mxu0
        %v675 = vpop.f32.mrf.mxu0
        %v676 = vadd.f32 %v481, %v675
        %v677 = vpop.f32.mrf.mxu0
        %678 = vmatprep.mubr.bf16.mxu0 0
        %679 = vmatmul.mubr.bf16.gmra.mxu0 %v589
        %v680 = vpop.f32.mrf.mxu0
        %v681 = vadd.f32 %v481, %v680
        %v682 = vpop.f32.mrf.mxu0
        %v683 = vpop.f32.mrf.mxu0
        %v684 = vadd.f32 %v481, %v683
        %v685 = vpop.f32.mrf.mxu0
        %686 = vmatprep.mubr.bf16.mxu0 0
        %687 = vmatmul.mubr.bf16.gmra.mxu0 %v592
        %v688 = vpop.f32.mrf.mxu0
        %v689 = vadd.f32 %v481, %v688
        %v690 = vpop.f32.mrf.mxu0
        %v691 = vpop.f32.mrf.mxu0
        %v692 = vadd.f32 %v481, %v691
        %v693 = vpop.f32.mrf.mxu0
        %694 = vmatprep.mubr.bf16.mxu0 0
        %695 = vmatmul.mubr.bf16.gmra.mxu0 %v595
        %v696 = vpop.f32.mrf.mxu0
        %v697 = vadd.f32 %v481, %v696
        %v698 = vpop.f32.mrf.mxu0
        %v699 = vpop.f32.mrf.mxu0
        %v700 = vadd.f32 %v481, %v699
        %v701 = vpop.f32.mrf.mxu0
        %702 = vmatprep.mubr.bf16.mxu0 0
        %703 = vmatmul.mubr.bf16.gmra.mxu0 %v598
        %v704 = vpop.f32.mrf.mxu0
        %v705 = vadd.f32 %v481, %v704
        %v706 = vpop.f32.mrf.mxu0
        %v707 = vpop.f32.mrf.mxu0
        %v708 = vadd.f32 %v481, %v707
        %v709 = vpop.f32.mrf.mxu0
        %710 = vmatprep.mubr.bf16.mxu0 0
        %711 = vmatmul.mubr.bf16.gmra.mxu0 %v601
        %v712 = vpop.f32.mrf.mxu0
        %v713 = vadd.f32 %v481, %v712
        %v714 = vpop.f32.mrf.mxu0
        %v715 = vpop.f32.mrf.mxu0
        %v716 = vadd.f32 %v481, %v715
        %v717 = vpop.f32.mrf.mxu0
        %718 = vmatprep.mubr.bf16.mxu0 0
        %719 = vmatmul.mubr.bf16.gmra.mxu0 %v604
        %v720 = vpop.f32.mrf.mxu0
        %v721 = vadd.f32 %v481, %v720
        %v722 = vpop.f32.mrf.mxu0
        %v723 = vpop.f32.mrf.mxu0
        %v724 = vadd.f32 %v481, %v723
        %v725 = vpop.f32.mrf.mxu0
        %726 = vmatprep.mubr.bf16.mxu0 0
        %727 = vmatmul.mubr.bf16.gmra.mxu0 %v607
        %v728 = vpop.f32.mrf.mxu0
        %v729 = vadd.f32 %v481, %v728
        %v730 = vpop.f32.mrf.mxu0
        %v731 = vpop.f32.mrf.mxu0
        %v732 = vadd.f32 %v481, %v731
        %v733 = vpop.f32.mrf.mxu0
        %734 = vmatprep.mubr.bf16.mxu0 0
        %735 = vmatmul.mubr.bf16.gmra.mxu0 %v610
        %v736 = vpop.f32.mrf.mxu0
        %v737 = vadd.f32 %v481, %v736
        %v738 = vpop.f32.mrf.mxu0
        %v739 = vpop.f32.mrf.mxu0
        %v740 = vadd.f32 %v481, %v739
        %v741 = vpop.f32.mrf.mxu0
        %742 = vmatprep.mubr.bf16.mxu0 0
        %743 = vmatmul.mubr.bf16.gmra.mxu0 %v613
        %v744 = vpop.f32.mrf.mxu0
        %v745 = vadd.f32 %v481, %v744
        %v746 = vpop.f32.mrf.mxu0
        %v747 = vpop.f32.mrf.mxu0
        %v748 = vadd.f32 %v481, %v747
        %v749 = vpop.f32.mrf.mxu0
        %750 = vmatprep.mubr.bf16.mxu0 0
        %751 = vmatmul.mubr.bf16.gmra.mxu0 %v616
        %v752 = vpop.f32.mrf.mxu0
        %v753 = vadd.f32 %v481, %v752
        %v754 = vpop.f32.mrf.mxu0
        %v755 = vpop.f32.mrf.mxu0
        %v756 = vadd.f32 %v481, %v755
        %v757 = vpop.f32.mrf.mxu0
        %758 = vmatprep.mubr.bf16.mxu0 0
        %759 = vmatmul.mubr.bf16.gmra.mxu0 %v619
        %v760 = vpop.f32.mrf.mxu0
        %v761 = vadd.f32 %v481, %v760
        %v762 = vpop.f32.mrf.mxu0
        %v763 = vpop.f32.mrf.mxu0
        %v764 = vadd.f32 %v481, %v763
        %v765 = vpop.f32.mrf.mxu0
        %766 = vmatprep.mubr.bf16.mxu0 0
        %767 = vmatmul.mubr.bf16.gmra.mxu0 %v622
        %v768 = vpop.f32.mrf.mxu0
        %v769 = vadd.f32 %v481, %v768
        %v770 = vpop.f32.mrf.mxu0
        %v771 = vpop.f32.mrf.mxu0
        %v772 = vadd.f32 %v481, %v771
        %v773 = vpop.f32.mrf.mxu0
        %774 = vmatprep.mubr.bf16.mxu0 0
        %775 = vmatmul.mubr.bf16.gmra.mxu0 %v625
        %v776 = vpop.f32.mrf.mxu0
        %v777 = vadd.f32 %v481, %v776
        %v778 = vpop.f32.mrf.mxu0
        %v779 = vpop.f32.mrf.mxu0
        %v780 = vadd.f32 %v481, %v779
        %v781 = vpop.f32.mrf.mxu0
        %782 = vmatprep.mubr.bf16.mxu0 0
        %783 = vmatmul.mubr.bf16.gmra.mxu0 %v628
        %v784 = vpop.f32.mrf.mxu0
        %v785 = vadd.f32 %v481, %v784
        %v786 = vpop.f32.mrf.mxu0
        %v787 = vpop.f32.mrf.mxu0
        %v788 = vadd.f32 %v481, %v787
        %v789 = vpop.f32.mrf.mxu0
        %790 = vdwg.mxu0
        %v791 = vmax.f32 %v665, 0.0
        %v792 = vmax.f32 %v668, 0.0
        %v793 = vmax.f32 %v673, 0.0
        %v794 = vmax.f32 %v676, 0.0
        %v795 = vmax.f32 %v681, 0.0
        %v796 = vmax.f32 %v684, 0.0
        %v797 = vmax.f32 %v689, 0.0
        %v798 = vmax.f32 %v692, 0.0
        %v799 = vmax.f32 %v697, 0.0
        %v800 = vmax.f32 %v700, 0.0
        %v801 = vmax.f32 %v705, 0.0
        %v802 = vmax.f32 %v708, 0.0
        %v803 = vmax.f32 %v713, 0.0
        %v804 = vmax.f32 %v716, 0.0
        %v805 = vmax.f32 %v721, 0.0
        %v806 = vmax.f32 %v724, 0.0
        %v807 = vmax.f32 %v729, 0.0
        %v808 = vmax.f32 %v732, 0.0
        %v809 = vmax.f32 %v737, 0.0
        %v810 = vmax.f32 %v740, 0.0
        %v811 = vmax.f32 %v745, 0.0
        %v812 = vmax.f32 %v748, 0.0
        %v813 = vmax.f32 %v753, 0.0
        %v814 = vmax.f32 %v756, 0.0
        %v815 = vmax.f32 %v761, 0.0
        %v816 = vmax.f32 %v764, 0.0
        %v817 = vmax.f32 %v769, 0.0
        %v818 = vmax.f32 %v772, 0.0
        %v819 = vmax.f32 %v777, 0.0
        %v820 = vmax.f32 %v780, 0.0
        %v821 = vmax.f32 %v785, 0.0
        %v822 = vmax.f32 %v788, 0.0
        %vm823 = vcmask 130048
        %v824 = vsel %vm823, %v791, 0.0
        %v825 = vsel %vm823, %v792, 0.0
        %v826 = vadd.f32 %v824, %v825
        %v827 = vsel %vm823, %v793, 0.0
        %v828 = vadd.f32 %v826, %v827
        %v829 = vsel %vm823, %v794, 0.0
        %v830 = vadd.f32 %v828, %v829
        %v831 = vsel %vm823, %v795, 0.0
        %v832 = vadd.f32 %v830, %v831
        %v833 = vsel %vm823, %v796, 0.0
        %v834 = vadd.f32 %v832, %v833
        %v835 = vsel %vm823, %v797, 0.0
        %v836 = vadd.f32 %v834, %v835
        %v837 = vsel %vm823, %v798, 0.0
        %v838 = vadd.f32 %v836, %v837
        %v839 = vsel %vm823, %v799, 0.0
        %v840 = vadd.f32 %v838, %v839
        %v841 = vsel %vm823, %v800, 0.0
        %v842 = vadd.f32 %v840, %v841
        %v843 = vsel %vm823, %v801, 0.0
        %v844 = vadd.f32 %v842, %v843
        %v845 = vsel %vm823, %v802, 0.0
        %v846 = vadd.f32 %v844, %v845
        %v847 = vsel %vm823, %v803, 0.0
        %v848 = vadd.f32 %v846, %v847
        %v849 = vsel %vm823, %v804, 0.0
        %v850 = vadd.f32 %v848, %v849
        %v851 = vsel %vm823, %v805, 0.0
        %v852 = vadd.f32 %v850, %v851
        %v853 = vsel %vm823, %v806, 0.0
        %v854 = vadd.f32 %v852, %v853
        %v855 = vsel %vm823, %v807, 0.0
        %v856 = vadd.f32 %v854, %v855
        %v857 = vsel %vm823, %v808, 0.0
        %v858 = vadd.f32 %v856, %v857
        %v859 = vsel %vm823, %v809, 0.0
        %v860 = vadd.f32 %v858, %v859
        %v861 = vsel %vm823, %v810, 0.0
        %v862 = vadd.f32 %v860, %v861
        %v863 = vsel %vm823, %v811, 0.0
        %v864 = vadd.f32 %v862, %v863
        %v865 = vsel %vm823, %v812, 0.0
        %v866 = vadd.f32 %v864, %v865
        %v867 = vsel %vm823, %v813, 0.0
        %v868 = vadd.f32 %v866, %v867
        %v869 = vsel %vm823, %v814, 0.0
        %v870 = vadd.f32 %v868, %v869
        %v871 = vsel %vm823, %v815, 0.0
        %v872 = vadd.f32 %v870, %v871
        %v873 = vsel %vm823, %v816, 0.0
        %v874 = vadd.f32 %v872, %v873
        %v875 = vsel %vm823, %v817, 0.0
        %v876 = vadd.f32 %v874, %v875
        %v877 = vsel %vm823, %v818, 0.0
        %v878 = vadd.f32 %v876, %v877
        %v879 = vsel %vm823, %v819, 0.0
        %v880 = vadd.f32 %v878, %v879
        %v881 = vsel %vm823, %v820, 0.0
        %v882 = vadd.f32 %v880, %v881
        %v883 = vsel %vm823, %v821, 0.0
        %v884 = vadd.f32 %v882, %v883
        %v885 = vsel %vm823, %v822, 0.0
        %v886 = vadd.f32 %v884, %v885
        %v887 = vrot.slane %v886, 4
        %v888 = vadd.f32 %v886, %v887
        %v889 = vrot.slane %v888, 2
        %v890 = vadd.f32 %v888, %v889
        %v891 = vrot.slane %v890, 1
        %v892 = vadd.f32 %v890, %v891
        %s893 = scalar_lea.vmem [#allocation2], %s430
        %vm894 = vcmask 122880
        %895 = vst.msk [vmem:[%s893] sm:$0x1] %vm894, %v892
      $region69: #{network_forward.1} parent=63 // loop_footer
        %s434 = sadd.s32 1, %s430
      $region70: #{network_forward.1} parent=63 // loop_footer_branch
        %429 = sbr.rel target = $region66
      $region71: #{network_forward.1} parent=63 // loop_exit
        _
      %v896 = vld [vmem:[#allocation2] sm:$0xff]
      %v897 = vmul.f32 %v896, 0.00390625
      %v898 = vpack.c.bf16 %v897, %v897
      %v899 = vld [vmem:[%s3] sm:$0xf]
      %v900 = vld [vmem:[%s3 + $0x4] sm:$0xf]
      %v901 = vld [vmem:[%s4] sm:$0x1]
      %v903 = vlaneseq
      %v904 = vshrl.u32 %v903, 7
      %v905 = vsub.s32 0, %v904
      %v906 = vrot.slane %v901, %v905
      %v910 = vunpack.c.l.b16 %v899
      %v911 = vunpack.c.l.b16 %v900
      %v912 = vpack.c.b16 %v911, %v910
      %vm914 = vcmask 130048
      %v916 = vsel %vm914, %v898, 0
      %918 = vmatprep.subr.bf16.mxu0 0
      %919 = vmatpush1.bf16.msra.mxu0 0
      %920 = vmatprep.subr.bf16.mxu0 0
      %921 = vmatpush1.bf16.msra.mxu0 0
      %922 = vmatprep.subr.bf16.mxu0 0
      %923 = vmatpush1.bf16.msra.mxu0 0
      %924 = vmatprep.subr.bf16.mxu0 0
      %925 = vmatpush1.bf16.msra.mxu0 0
      %926 = vmatprep.subr.bf16.mxu0 0
      %927 = vmatpush1.bf16.msra.mxu0 0
      %928 = vmatprep.subr.bf16.mxu0 0
      %929 = vmatpush1.bf16.msra.mxu0 0
      %930 = vmatprep.subr.bf16.mxu0 0
      %931 = vmatpush1.bf16.msra.mxu0 0
      %932 = vmatprep.subr.bf16.mxu0 0
      %933 = vmatpush1.bf16.msra.mxu0 %v912
      %934 = vmatprep.subr.bf16.mxu0 0
      %935 = vmatpush2.bf16.msra.mxu0 0
      %936 = vmatprep.subr.bf16.mxu0 0
      %937 = vmatpush2.bf16.msra.mxu0 0
      %938 = vmatprep.subr.bf16.mxu0 0
      %939 = vmatpush2.bf16.msra.mxu0 0
      %940 = vmatprep.subr.bf16.mxu0 0
      %941 = vmatpush2.bf16.msra.mxu0 0
      %942 = vmatprep.subr.bf16.mxu0 0
      %943 = vmatpush2.bf16.msra.mxu0 0
      %944 = vmatprep.subr.bf16.mxu0 0
      %945 = vmatpush2.bf16.msra.mxu0 0
      %946 = vmatprep.subr.bf16.mxu0 0
      %947 = vmatpush2.bf16.msra.mxu0 0
      %948 = vmatprep.subr.bf16.mxu0 0
      %949 = vmatpush2.bf16.msra.mxu0 0
      %950 = vmatprep.mubr.bf16.mxu0 0
      %951 = vmatmul.mubr.bf16.gmra.mxu0 %v916
      %v952 = vpop.f32.mrf.mxu0
      %v953 = vadd.f32 %v906, %v952
      %v954 = vpop.f32.mrf.mxu0
      %v955 = vpop.f32.mrf.mxu0
      %v956 = vpop.f32.mrf.mxu0
      %957 = vdwg.mxu0
      %v958 = vmax.f32 %v953, 0.0
      %v959 = vpack.c.bf16 %v958, %v958
      %v960 = vld [vmem:[%s5] sm:$0xf]
      %v961 = vld [vmem:[%s5 + $0x4] sm:$0xf]
      %v962 = vld [vmem:[%s5 + $0x8] sm:$0xf]
      %v963 = vld [vmem:[%s5 + $0xc] sm:$0xf]
      %v964 = vld [vmem:[%s6] sm:$0x1]
      %v966 = vlaneseq
      %v967 = vshrl.u32 %v966, 7
      %v968 = vsub.s32 0, %v967
      %v969 = vrot.slane %v964, %v968
      %v975 = vunpack.c.l.b16 %v960
      %v976 = vunpack.c.l.b16 %v961
      %v977 = vunpack.c.l.b16 %v962
      %v978 = vunpack.c.l.b16 %v963
      %v979 = vpack.c.b16 %v976, %v975
      %v980 = vpack.c.b16 %v978, %v977
      %vm983 = vcmask 261120
      %v985 = vsel %vm983, %v959, 0
      %987 = vmatprep.subr.bf16.mxu0 0
      %988 = vmatpush1.bf16.msra.mxu0 0
      %989 = vmatprep.subr.bf16.mxu0 0
      %990 = vmatpush1.bf16.msra.mxu0 0
      %991 = vmatprep.subr.bf16.mxu0 0
      %992 = vmatpush1.bf16.msra.mxu0 0
      %993 = vmatprep.subr.bf16.mxu0 0
      %994 = vmatpush1.bf16.msra.mxu0 0
      %995 = vmatprep.subr.bf16.mxu0 0
      %996 = vmatpush1.bf16.msra.mxu0 0
      %997 = vmatprep.subr.bf16.mxu0 0
      %998 = vmatpush1.bf16.msra.mxu0 0
      %999 = vmatprep.subr.bf16.mxu0 0
      %1000 = vmatpush1.bf16.msra.mxu0 %v980
      %1001 = vmatprep.subr.bf16.mxu0 0
      %1002 = vmatpush1.bf16.msra.mxu0 %v979
      %1003 = vmatprep.subr.bf16.mxu0 0
      %1004 = vmatpush2.bf16.msra.mxu0 0
      %1005 = vmatprep.subr.bf16.mxu0 0
      %1006 = vmatpush2.bf16.msra.mxu0 0
      %1007 = vmatprep.subr.bf16.mxu0 0
      %1008 = vmatpush2.bf16.msra.mxu0 0
      %1009 = vmatprep.subr.bf16.mxu0 0
      %1010 = vmatpush2.bf16.msra.mxu0 0
      %1011 = vmatprep.subr.bf16.mxu0 0
      %1012 = vmatpush2.bf16.msra.mxu0 0
      %1013 = vmatprep.subr.bf16.mxu0 0
      %1014 = vmatpush2.bf16.msra.mxu0 0
      %1015 = vmatprep.subr.bf16.mxu0 0
      %1016 = vmatpush2.bf16.msra.mxu0 0
      %1017 = vmatprep.subr.bf16.mxu0 0
      %1018 = vmatpush2.bf16.msra.mxu0 0
      %1019 = vmatprep.mubr.bf16.mxu0 0
      %1020 = vmatmul.mubr.bf16.gmra.mxu0 %v985
      %v1021 = vpop.f32.mrf.mxu0
      %v1022 = vadd.f32 %v969, %v1021
      %v1023 = vpop.f32.mrf.mxu0
      %v1024 = vpop.f32.mrf.mxu0
      %v1025 = vpop.f32.mrf.mxu0
      %1026 = vdwg.mxu0
      %v1027 = vmul.f32 %v1022, %v1022
      %1028 = vadd.xlane.f32.xlu0 %v1027
      %v1029 = vpop.xlane.xlu0 %1028
      %v1030 = vmax.f32 %v1029, 1e-24
      %v1031 = vrsqrt.pop %v1030
      %v1032 = vmul.f32 %v1022, %v1031
      %1033 = vst [vmem:[%s423] sm:$0xff] %v1032
      %v1034 = vld [vmem:[%s7] sm:$0xf]
      %v1035 = vld [vmem:[%s7 + $0x4] sm:$0xf]
      %v1036 = vld [vmem:[%s8] sm:$0x1]
      %v1038 = vlaneseq
      %v1039 = vshrl.u32 %v1038, 7
      %v1040 = vsub.s32 0, %v1039
      %v1041 = vrot.slane %v1036, %v1040
      %v1045 = vunpack.c.l.b16 %v1034
      %v1046 = vunpack.c.l.b16 %v1035
      %v1047 = vpack.c.b16 %v1046, %v1045
      %1049 = vmatprep.subr.bf16.mxu0 0
      %1050 = vmatpush1.bf16.msra.mxu0 0
      %1051 = vmatprep.subr.bf16.mxu0 0
      %1052 = vmatpush1.bf16.msra.mxu0 0
      %1053 = vmatprep.subr.bf16.mxu0 0
      %1054 = vmatpush1.bf16.msra.mxu0 0
      %1055 = vmatprep.subr.bf16.mxu0 0
      %1056 = vmatpush1.bf16.msra.mxu0 0
      %1057 = vmatprep.subr.bf16.mxu0 0
      %1058 = vmatpush1.bf16.msra.mxu0 0
      %1059 = vmatprep.subr.bf16.mxu0 0
      %1060 = vmatpush1.bf16.msra.mxu0 0
      %1061 = vmatprep.subr.bf16.mxu0 0
      %1062 = vmatpush1.bf16.msra.mxu0 0
      %1063 = vmatprep.subr.bf16.mxu0 0
      %1064 = vmatpush1.bf16.msra.mxu0 %v1047
      %1065 = vmatprep.subr.bf16.mxu0 0
      %1066 = vmatpush2.bf16.msra.mxu0 0
      %1067 = vmatprep.subr.bf16.mxu0 0
      %1068 = vmatpush2.bf16.msra.mxu0 0
      %1069 = vmatprep.subr.bf16.mxu0 0
      %1070 = vmatpush2.bf16.msra.mxu0 0
      %1071 = vmatprep.subr.bf16.mxu0 0
      %1072 = vmatpush2.bf16.msra.mxu0 0
      %1073 = vmatprep.subr.bf16.mxu0 0
      %1074 = vmatpush2.bf16.msra.mxu0 0
      %1075 = vmatprep.subr.bf16.mxu0 0
      %1076 = vmatpush2.bf16.msra.mxu0 0
      %1077 = vmatprep.subr.bf16.mxu0 0
      %1078 = vmatpush2.bf16.msra.mxu0 0
      %1079 = vmatprep.subr.bf16.mxu0 0
      %1080 = vmatpush2.bf16.msra.mxu0 0
      %1081 = vmatprep.mubr.bf16.mxu0 0
      %1082 = vmatmul.mubr.bf16.gmra.mxu0 %v916
      %v1083 = vpop.f32.mrf.mxu0
      %v1084 = vadd.f32 %v1041, %v1083
      %v1085 = vpop.f32.mrf.mxu0
      %v1086 = vpop.f32.mrf.mxu0
      %v1087 = vpop.f32.mrf.mxu0
      %1088 = vdwg.mxu0
      %v1089 = vmax.f32 %v1084, 0.0
      %v1090 = vpack.c.bf16 %v1089, %v1089
      %v1091 = vld [vmem:[%s9] sm:$0xf]
      %v1092 = vld [vmem:[%s9 + $0x4] sm:$0xf]
      %v1093 = vld [vmem:[%s9 + $0x8] sm:$0xf]
      %v1094 = vld [vmem:[%s9 + $0xc] sm:$0xf]
      %v1095 = vld [vmem:[%s10] sm:$0x1]
      %v1097 = vlaneseq
      %v1098 = vshrl.u32 %v1097, 7
      %v1099 = vsub.s32 0, %v1098
      %v1100 = vrot.slane %v1095, %v1099
      %v1106 = vunpack.c.l.b16 %v1091
      %v1107 = vunpack.c.l.b16 %v1092
      %v1108 = vunpack.c.l.b16 %v1093
      %v1109 = vunpack.c.l.b16 %v1094
      %v1110 = vpack.c.b16 %v1107, %v1106
      %v1111 = vpack.c.b16 %v1109, %v1108
      %v1115 = vsel %vm983, %v1090, 0
      %1117 = vmatprep.subr.bf16.mxu0 0
      %1118 = vmatpush1.bf16.msra.mxu0 0
      %1119 = vmatprep.subr.bf16.mxu0 0
      %1120 = vmatpush1.bf16.msra.mxu0 0
      %1121 = vmatprep.subr.bf16.mxu0 0
      %1122 = vmatpush1.bf16.msra.mxu0 0
      %1123 = vmatprep.subr.bf16.mxu0 0
      %1124 = vmatpush1.bf16.msra.mxu0 0
      %1125 = vmatprep.subr.bf16.mxu0 0
      %1126 = vmatpush1.bf16.msra.mxu0 0
      %1127 = vmatprep.subr.bf16.mxu0 0
      %1128 = vmatpush1.bf16.msra.mxu0 0
      %1129 = vmatprep.subr.bf16.mxu0 0
      %1130 = vmatpush1.bf16.msra.mxu0 %v1111
      %1131 = vmatprep.subr.bf16.mxu0 0
      %1132 = vmatpush1.bf16.msra.mxu0 %v1110
      %1133 = vmatprep.subr.bf16.mxu0 0
      %1134 = vmatpush2.bf16.msra.mxu0 0
      %1135 = vmatprep.subr.bf16.mxu0 0
      %1136 = vmatpush2.bf16.msra.mxu0 0
      %1137 = vmatprep.subr.bf16.mxu0 0
      %1138 = vmatpush2.bf16.msra.mxu0 0
      %1139 = vmatprep.subr.bf16.mxu0 0
      %1140 = vmatpush2.bf16.msra.mxu0 0
      %1141 = vmatprep.subr.bf16.mxu0 0
      %1142 = vmatpush2.bf16.msra.mxu0 0
      %1143 = vmatprep.subr.bf16.mxu0 0
      %1144 = vmatpush2.bf16.msra.mxu0 0
      %1145 = vmatprep.subr.bf16.mxu0 0
      %1146 = vmatpush2.bf16.msra.mxu0 0
      %1147 = vmatprep.subr.bf16.mxu0 0
      %1148 = vmatpush2.bf16.msra.mxu0 0
      %1149 = vmatprep.mubr.bf16.mxu0 0
      %1150 = vmatmul.mubr.bf16.gmra.mxu0 %v1115
      %v1151 = vpop.f32.mrf.mxu0
      %v1152 = vadd.f32 %v1100, %v1151
      %v1153 = vpop.f32.mrf.mxu0
      %v1154 = vpop.f32.mrf.mxu0
      %v1155 = vpop.f32.mrf.mxu0
      %1156 = vdwg.mxu0
      %v1157 = vlaneseq
      %v1158 = vand.u32 %v1157, 127
      %vm1159 = vcmp.lt.s32.totalorder %v1158, 10
      %v1160 = vsel %vm1159, %v1152, -1e+30
      %1161 = vmax.xlane.f32.xlu0 %v1160
      %v1162 = vpop.xlane.xlu0 %1161
      %v1163 = vsub.f32 %v1160, %v1162
      %v1164 = vmul.f32 %v1163, 1.442695
      %v1165 = vpow.pop %v1164
      %1166 = vadd.xlane.f32.xlu0 %v1165
      %v1167 = vpop.xlane.xlu0 %1166
      %v1168 = vrcp.pop %v1167
      %v1169 = vmul.f32 %v1165, %v1168
      %1170 = vst [vmem:[%s427] sm:$0xff] %v1169
      %p1171 = scmp.lt.s32.totalorder %s24, 1
      %s1172 = scalar_select %p1171, %s24, 1
      %s1173 = smul.addr %s1172, 8
      %s1174 = scalar_lea.vmem %s11, %s1173
      %p1175 = scmp.lt.s32.totalorder %s24, 1
      %s1176 = scalar_select %p1175, %s24, 1
      %s1177 = smul.addr %s1176, 8
      %s1178 = scalar_lea.vmem %s12, %s1177
      // Predicated region
      $region72: #{network_forward.1} parent=63 // pred_check
        %p1179 = pneg %p278
      $region73: #{network_forward.1} parent=63 // pred_check_branch
        %1181 = sbr.rel (%p1179) target = $region75
      $region74: #{network_forward.1} parent=63 // pred_region
        _
      $region75: #{network_forward.1} parent=63 // pred_fallthru
        _
      // Predicated region
      $region76: #{network_forward.1} parent=63 // pred_check
        %p1182 = pneg %p304
      $region77: #{network_forward.1} parent=63 // pred_check_branch
        %1184 = sbr.rel (%p1182) target = $region79
      $region78: #{network_forward.1} parent=63 // pred_region
        _
      $region79: #{network_forward.1} parent=63 // pred_fallthru
        _
    $region64: #{network_forward.1} parent=5 // pred_fallthru
      _
    %p1185 = scmp.le.s32.totalorder 2, %s19
    // Predicated region
    $region80: #{network_forward.1} parent=5 // pred_check
      %p1186 = pneg %p1185
    $region81: #{network_forward.1} parent=5 // pred_check_branch
      %1188 = sbr.rel (%p1186) target = $region83
    $region82: #{network_forward.1} parent=5 // pred_region
      %s1189 = ssub.s32 %s19, 2
      // Predicated region
      $region84: #{network_forward.1} parent=82 // pred_check
        %p1190 = pneg %p284
      $region85: #{network_forward.1} parent=82 // pred_check_branch
        %1192 = sbr.rel (%p1190) target = $region87
      $region86: #{network_forward.1} parent=82 // pred_region
        %p1193 = scmp.lt.s32.totalorder %s25, 1
        %s1194 = scalar_select %p1193, %s25, 1
        %s1195 = smul.addr %s1194, 8
        %s1196 = scalar_lea.vmem %s11, %s1195
      $region87: #{network_forward.1} parent=82 // pred_fallthru
        _
      // Predicated region
      $region88: #{network_forward.1} parent=82 // pred_check
        %p1197 = pneg %p310
      $region89: #{network_forward.1} parent=82 // pred_check_branch
        %1199 = sbr.rel (%p1197) target = $region91
      $region90: #{network_forward.1} parent=82 // pred_region
        %p1200 = scmp.lt.s32.totalorder %s25, 1
        %s1201 = scalar_select %p1200, %s25, 1
        %s1202 = smul.addr %s1201, 8
        %s1203 = scalar_lea.vmem %s12, %s1202
      $region91: #{network_forward.1} parent=82 // pred_fallthru
        _
    $region83: #{network_forward.1} parent=5 // pred_fallthru
      _
  $region6: #{network_forward.1} parent=0 // loop_footer
    %s23 = sadd.s32 1, %s19
  $region7: #{network_forward.1} parent=0 // loop_footer_branch
    %18 = sbr.rel target = $region3
  $region8: #{network_forward.1} parent=0 // loop_exit
    _

</llo_original>
